<compile_context>
chip_gen: v7x
topology: tpu7x:2x2x1
jax: 0.10.0
libtpu: 0.0.40
codegen_flags: <defaults>
</compile_context>

<pallas_src>
import math

import jax
import jax.numpy as jnp
from jax.experimental import pallas as pl
from jax.experimental.pallas import tpu as pltpu


def _ddn_kernel(x_ref, w1_ref, b1_ref, w2_ref, b2_ref, o_ref):
    # backbone: Linear(input_dim -> hidden), f32 accumulation on the MXU
    h = jnp.dot(x_ref[...], w1_ref[...], preferred_element_type=jnp.float32)
    h = h + b1_ref[...]                       # broadcast [1, H_pad] over [tb, H_pad]
    # activation: SiLU(x) = x * sigmoid(x)   (sigmoid -> EUP, mul -> VPU)
    h = h * jax.nn.sigmoid(h)
    # head: Linear(hidden -> padded max_seq_len + 1)
    out = jnp.dot(h, w2_ref[...], preferred_element_type=jnp.float32)
    o_ref[...] = (out + b2_ref[...]).astype(o_ref.dtype)


def _round_up(n, m):
    return ((n + m - 1) // m) * m


def _pad_axis(a, axis, target):
    pad = target - a.shape[axis]
    if pad <= 0:
        return a
    widths = [(0, 0)] * a.ndim
    widths[axis] = (0, pad)
    return jnp.pad(a, widths)


def _num_tensorcores():
    """v7x has 2 TensorCores per chip; v5e/v6e have 1."""
    try:
        kind = jax.devices()[0].device_kind.lower()
        if "v7" in kind:
            return 2
    except Exception:
        pass
    return 1


def _choose_block_b(batch, num_cores):
    """Generation-aware batch tile.

    Single-TC (v5e/v6e): one grid step for small/medium B; cap tiles at 1024 rows.
    Dual-TC (v7x): even grid-step count so ("parallel",) shards across both cores,
    with tiles up to 1024 rows to amortize the fixed per-step overhead.
    """
    if num_cores <= 1:
        return min(1024, _round_up(batch, 8))
    half = _round_up((batch + 1) // 2, 8)
    return min(1024, half)


def prepare_params(w1, b1, w2, b2):
    """Pad weights/biases to lane-dense shapes ONCE (cache across forward calls).

    w1: [D_in, H], b1: [1, H], w2: [H, O], b2: [1, O].
    K axis (D_in) is left un-padded to match the un-padded x.
    Zero padding is numerically exact: bias-add, SiLU (sigmoid(0)*0 = 0) and the
    second matmul all propagate zeros, so sliced logits are unchanged.
    """
    H = w1.shape[1]
    O = w2.shape[1]
    H_pad = _round_up(H, 128)
    O_pad = _round_up(O, 128)
    w1_p = _pad_axis(w1, 1, H_pad)
    b1_p = _pad_axis(b1, 1, H_pad)
    w2_p = _pad_axis(_pad_axis(w2, 0, H_pad), 1, O_pad)
    b2_p = _pad_axis(b2, 1, O_pad)
    return w1_p, b1_p, w2_p, b2_p


def discrete_distribution_net_forward(x, w1_p, b1_p, w2_p, b2_p, *,
                                      out_dim, block_b=None, return_padded=False):
    """x: [B, D_in] f32.  w1_p/b1_p/w2_p/b2_p: pre-padded params from prepare_params().
    Returns logits [B, out_dim] (or the padded [B_pad, O_pad] slab if return_padded)."""
    B, D_in = x.shape
    assert w1_p.shape[0] == D_in, "w1 K axis must match un-padded D_in"
    H_pad = w1_p.shape[1]
    O_pad = w2_p.shape[1]

    if block_b is None:
        block_b = _choose_block_b(B, _num_tensorcores())
    block_b = max(8, _round_up(block_b, 8))
    B_pad = _round_up(B, block_b)
    x_p = _pad_axis(x, 0, B_pad)          # batch pad only (no-op when divisible)

    grid = (B_pad // block_b,)

    itemsize = jnp.dtype(x.dtype).itemsize
    cost = pl.CostEstimate(
        flops=2 * B_pad * (D_in * H_pad + H_pad * O_pad),
        transcendentals=B_pad * H_pad,     # sigmoid in SiLU
        bytes_accessed=(x_p.size + w1_p.size + b1_p.size + w2_p.size + b2_p.size
                        + B_pad * O_pad) * itemsize,
    )

    out_padded = pl.pallas_call(
        _ddn_kernel,
        out_shape=jax.ShapeDtypeStruct((B_pad, O_pad), x.dtype),
        grid=grid,
        in_specs=[
            # x tile: last dim == full D_in (exempt from the 128 rule) -> no D padding.
            pl.BlockSpec((block_b, D_in), lambda i: (i, 0)),
            pl.BlockSpec((D_in, H_pad), lambda i: (0, 0)),     # backbone weight (resident)
            pl.BlockSpec((1, H_pad), lambda i: (0, 0)),        # backbone bias
            pl.BlockSpec((H_pad, O_pad), lambda i: (0, 0)),    # head weight (resident)
            pl.BlockSpec((1, O_pad), lambda i: (0, 0)),        # head bias
        ],
        out_specs=pl.BlockSpec((block_b, O_pad), lambda i: (i, 0)),
        compiler_params=pltpu.CompilerParams(
            dimension_semantics=("parallel",),
            vmem_limit_bytes=32 * 1024 * 1024,   # explicit: v5e scoped default is only 16 MiB
        ),
        cost_estimate=cost,
    )(x_p, w1_p, b1_p, w2_p, b2_p)

    if return_padded:
        return out_padded
    return out_padded[:B, :out_dim]


def _reference_forward(x, w1, b1, w2, b2):
    h = x @ w1 + b1
    h = h * jax.nn.sigmoid(h)
    return h @ w2 + b2


if __name__ == "__main__":
    # TODO(synk): TBackbone is abstract in the original code; a single dense
    # layer stands in for it here (same forward contract: input_dim -> output_dim).
    key = jax.random.PRNGKey(0)
    k_x, k_w1, k_b1, k_w2, k_b2 = jax.random.split(key, 5)

    batch = 16
    input_dim = 64          # backbone.input_dim
    hidden = 128            # backbone.ouput_dim
    max_seq_len = 8
    out_dim = max_seq_len + 1

    x = jax.random.normal(k_x, (batch, input_dim), dtype=jnp.float32)

    # Deterministic parameter init (Kaiming-uniform-ish scaling, like nn.Linear).
    lim1 = 1.0 / math.sqrt(input_dim)
    w1 = jax.random.uniform(k_w1, (input_dim, hidden), jnp.float32, -lim1, lim1)
    b1 = jax.random.uniform(k_b1, (1, hidden), jnp.float32, -lim1, lim1)
    lim2 = 1.0 / math.sqrt(hidden)
    w2 = jax.random.uniform(k_w2, (hidden, out_dim), jnp.float32, -lim2, lim2)
    b2 = jax.random.uniform(k_b2, (1, out_dim), jnp.float32, -lim2, lim2)

    # Pad params ONCE (hoisted out of the forward path).
    w1_p, b1_p, w2_p, b2_p = prepare_params(w1, b1, w2, b2)
    w1_p, b1_p, w2_p, b2_p = jax.block_until_ready((w1_p, b1_p, w2_p, b2_p))

    out = discrete_distribution_net_forward(x, w1_p, b1_p, w2_p, b2_p, out_dim=out_dim)
    out = jax.block_until_ready(out)

    ref = _reference_forward(x, w1, b1, w2, b2)
    assert out.shape == (batch, out_dim)
    assert jnp.allclose(out, ref, atol=1e-5, rtol=1e-5), "mismatch vs JAX reference"

    print("KERNEL_OK")
</pallas_src>

<mosaic_0001>
module attributes {stable_mosaic.version = 11 : i64} {
  func.func @_ddn_kernel(%arg0: i32, %arg1: memref<16x64xf32, #tpu.memory_space<vmem>>, %arg2: memref<64x128xf32, #tpu.memory_space<vmem>>, %arg3: memref<1x128xf32, #tpu.memory_space<vmem>>, %arg4: memref<128x128xf32, #tpu.memory_space<vmem>>, %arg5: memref<1x128xf32, #tpu.memory_space<vmem>>, %arg6: memref<16x128xf32, #tpu.memory_space<vmem>>) attributes {dimension_semantics = [#tpu.dimension_semantics<parallel>], iteration_bounds = array<i64: 1>, scalar_prefetch = 0 : i64, scratch_operands = 0 : i64, tpu.core_type = #tpu.core_type<tc>, window_params = [{transform_indices = @transform_0, window_bounds = array<i64: 16, 64>}, {pipeline_mode = #tpu.pipeline_mode<synchronous>, transform_indices = @transform_1, window_bounds = array<i64: 64, 128>}, {pipeline_mode = #tpu.pipeline_mode<synchronous>, transform_indices = @transform_2, window_bounds = array<i64: 1, 128>}, {pipeline_mode = #tpu.pipeline_mode<synchronous>, transform_indices = @transform_3, window_bounds = array<i64: 128, 128>}, {pipeline_mode = #tpu.pipeline_mode<synchronous>, transform_indices = @transform_4, window_bounds = array<i64: 1, 128>}, {transform_indices = @transform_5, window_bounds = array<i64: 16, 128>}]} {
    %c0 = arith.constant 0 : index
    %c0_0 = arith.constant 0 : index
    %0 = vector.load %arg1[%c0, %c0_0] : memref<16x64xf32, #tpu.memory_space<vmem>>, vector<16x64xf32>
    %c0_1 = arith.constant 0 : index
    %c0_2 = arith.constant 0 : index
    %1 = vector.load %arg2[%c0_1, %c0_2] : memref<64x128xf32, #tpu.memory_space<vmem>>, vector<64x128xf32>
    %cst = arith.constant dense<0.000000e+00> : vector<16x128xf32>
    %2 = tpu.matmul %0, %1, %cst {dimension_numbers = #tpu.dot_dimension_numbers<[1], [0], [0], [1], [0, 0, 1, 1], [], []>} : vector<16x64xf32>, vector<64x128xf32>, vector<16x128xf32> -> vector<16x128xf32>
    %c0_3 = arith.constant 0 : index
    %c0_4 = arith.constant 0 : index
    %3 = vector.load %arg3[%c0_3, %c0_4] : memref<1x128xf32, #tpu.memory_space<vmem>>, vector<1x128xf32>
    %4 = vector.broadcast %3 : vector<1x128xf32> to vector<16x128xf32>
    %5 = arith.addf %2, %4 : vector<16x128xf32>
    %6 = arith.negf %5 : vector<16x128xf32>
    %7 = math.exp %6 : vector<16x128xf32>
    %cst_5 = arith.constant 1.000000e+00 : f32
    %8 = vector.broadcast %cst_5 : f32 to vector<16x128xf32>
    %9 = arith.addf %8, %7 : vector<16x128xf32>
    %10 = arith.divf %8, %9 : vector<16x128xf32>
    %11 = arith.mulf %5, %10 : vector<16x128xf32>
    %c0_6 = arith.constant 0 : index
    %c0_7 = arith.constant 0 : index
    %12 = vector.load %arg4[%c0_6, %c0_7] : memref<128x128xf32, #tpu.memory_space<vmem>>, vector<128x128xf32>
    %cst_8 = arith.constant dense<0.000000e+00> : vector<16x128xf32>
    %13 = tpu.matmul %11, %12, %cst_8 {dimension_numbers = #tpu.dot_dimension_numbers<[1], [0], [0], [1], [0, 0, 1, 1], [], []>} : vector<16x128xf32>, vector<128x128xf32>, vector<16x128xf32> -> vector<16x128xf32>
    %c0_9 = arith.constant 0 : index
    %c0_10 = arith.constant 0 : index
    %14 = vector.load %arg5[%c0_9, %c0_10] : memref<1x128xf32, #tpu.memory_space<vmem>>, vector<1x128xf32>
    %15 = vector.broadcast %14 : vector<1x128xf32> to vector<16x128xf32>
    %16 = arith.addf %13, %15 : vector<16x128xf32>
    %c0_11 = arith.constant 0 : index
    %c0_12 = arith.constant 0 : index
    %17 = vector.load %arg6[%c0_11, %c0_12] : memref<16x128xf32, #tpu.memory_space<vmem>>, vector<16x128xf32>
    tpu.vector_store %arg6[%c0_11, %c0_12], %16 {strides = array<i32>} : memref<16x128xf32, #tpu.memory_space<vmem>>, vector<16x128xf32>,
    return
  }
  func.func @transform_0(%arg0: i32) -> (i32, i32) {
    %c0_i32 = arith.constant 0 : i32
    %c0_i32_0 = arith.constant 0 : i32
    return %arg0, %c0_i32 : i32, i32
  }
  func.func @transform_1(%arg0: i32) -> (i32, i32) {
    %c0_i32 = arith.constant 0 : i32
    %c0_i32_0 = arith.constant 0 : i32
    %c0_i32_1 = arith.constant 0 : i32
    return %c0_i32, %c0_i32_0 : i32, i32
  }
  func.func @transform_2(%arg0: i32) -> (i32, i32) {
    %c0_i32 = arith.constant 0 : i32
    %c0_i32_0 = arith.constant 0 : i32
    %c0_i32_1 = arith.constant 0 : i32
    return %c0_i32, %c0_i32_0 : i32, i32
  }
  func.func @transform_3(%arg0: i32) -> (i32, i32) {
    %c0_i32 = arith.constant 0 : i32
    %c0_i32_0 = arith.constant 0 : i32
    %c0_i32_1 = arith.constant 0 : i32
    return %c0_i32, %c0_i32_0 : i32, i32
  }
  func.func @transform_4(%arg0: i32) -> (i32, i32) {
    %c0_i32 = arith.constant 0 : i32
    %c0_i32_0 = arith.constant 0 : i32
    %c0_i32_1 = arith.constant 0 : i32
    return %c0_i32, %c0_i32_0 : i32, i32
  }
  func.func @transform_5(%arg0: i32) -> (i32, i32) {
    %c0_i32 = arith.constant 0 : i32
    %c0_i32_0 = arith.constant 0 : i32
    return %arg0, %c0_i32 : i32, i32
  }
}

</mosaic_0001>

<llo_original>
// kernel: tpu_custom_call.1
$region0: #{tpu_custom_call.1}
  #allocation0 [shape = 'u32[]', space=smem, size = 0x4, offset = 0x4, fixed_abs, tag = 'smem constant byte address 0x4 - core index']
  #allocation1 [shape = 'u32[144,128]{1,0:T(1,128)}', space=vmem, size = 0x12000, scoped, tag = 'internal scratch']
  %s0 = inlined_call_operand.hbm [shape: f32[16,64], index: 0, kind: input, shape index: {}]
  %s1 = inlined_call_operand.hbm [shape: f32[64,128], index: 1, kind: input, shape index: {}]
  %s2 = inlined_call_operand.vmem [shape: f32[1,128], index: 2, kind: input, shape index: {}]
  %s3 = inlined_call_operand.hbm [shape: f32[128,128], index: 3, kind: input, shape index: {}]
  %s4 = inlined_call_operand.vmem [shape: f32[1,128], index: 4, kind: input, shape index: {}]
  %s5 = inlined_call_operand.hbm [shape: f32[16,128], index: 5, kind: output, shape index: {}]
  %s6 = sld [smem:[#allocation0]]
  $region42: #{tpu_custom_call.1} parent=0
    _
  %s8 = ssub.s32 1, %s6
  %s9 = scalar_select 0, %s8, %s6
  $region1: #{tpu_custom_call.1} parent=0
    #allocation2 [shape = 'u8[8192]{0}', space=vmem, size = 0x2000, scoped, tag = 'input window, operand 0, single buffered']
    #allocation3 [shape = 's32[1]{0}', space=sflag, size = 0x4, scoped, tag = 'scoped memory for tpu_custom_call.1']
    #allocation4 [shape = 's32[1]{0}', space=sflag, size = 0x4, scoped, tag = 'scoped memory for tpu_custom_call.1']
    #allocation5 [shape = 'u8[32768]{0}', space=vmem, size = 0x8000, scoped, tag = 'input window, operand 1, single buffered']
    #allocation6 [shape = 's32[1]{0}', space=sflag, size = 0x4, scoped, tag = 'scoped memory for tpu_custom_call.1']
    #allocation7 [shape = 'u8[65536]{0}', space=vmem, size = 0x10000, scoped, tag = 'input window, operand 3, single buffered']
    #allocation8 [shape = 'u8[8192]{0}', space=vmem, size = 0x2000, scoped, tag = 'output window, operand 0, single buffered']
    %10 = vsyncpa [#allocation3], 0
    %11 = vsyncpa [#allocation6], 0
    %12 = vsyncpa [#allocation4], 0
    // Predicated region
    $region2: #{tpu_custom_call.1} parent=1 // pred_check
      _
    $region3: #{tpu_custom_call.1} parent=1 // pred_check_branch
      %14 = sbr.rel (0) target = $region5
    $region4: #{tpu_custom_call.1} parent=1 // pred_region
      %s16 = ssub.s32 256, 256
      %17 = vsyncadd [#allocation3], %s16
      %s18 = sshll.u32 [#allocation2], 4
      %s19 = int_to_ptr.vmem [resolvable:$true] %s18
      %24 = dma.hbm_to_vmem [thread:$0]  %s0, 256, %s19, [#allocation3], 128, 128, 8
    $region5: #{tpu_custom_call.1} parent=1 // pred_fallthru
      _
    // Predicated region
    $region6: #{tpu_custom_call.1} parent=1 // pred_check
      _
    $region7: #{tpu_custom_call.1} parent=1 // pred_check_branch
      %26 = sbr.rel (0) target = $region9
    $region8: #{tpu_custom_call.1} parent=1 // pred_region
      %s28 = ssub.s32 1024, 1024
      %29 = vsyncadd [#allocation6], %s28
      %s30 = sshll.u32 [#allocation5], 4
      %s31 = int_to_ptr.vmem [resolvable:$true] %s30
      %36 = dma.hbm_to_vmem [thread:$0]  %s1, 1024, %s31, [#allocation6], 128, 128, 8
    $region9: #{tpu_custom_call.1} parent=1 // pred_fallthru
      _
    // Predicated region
    $region10: #{tpu_custom_call.1} parent=1 // pred_check
      _
    $region11: #{tpu_custom_call.1} parent=1 // pred_check_branch
      %38 = sbr.rel (0) target = $region13
    $region12: #{tpu_custom_call.1} parent=1 // pred_region
      _
    $region13: #{tpu_custom_call.1} parent=1 // pred_fallthru
      _
    // Predicated region
    $region14: #{tpu_custom_call.1} parent=1 // pred_check
      _
    $region15: #{tpu_custom_call.1} parent=1 // pred_check_branch
      %40 = sbr.rel (0) target = $region17
    $region16: #{tpu_custom_call.1} parent=1 // pred_region
      %s42 = ssub.s32 2048, 2048
      %43 = vsyncadd [#allocation6], %s42
      %s44 = sshll.u32 [#allocation7], 4
      %s45 = int_to_ptr.vmem [resolvable:$true] %s44
      %50 = dma.hbm_to_vmem [thread:$0]  %s3, 2048, %s45, [#allocation6], 128, 128, 8
    $region17: #{tpu_custom_call.1} parent=1 // pred_fallthru
      _
    // Predicated region
    $region18: #{tpu_custom_call.1} parent=1 // pred_check
      _
    $region19: #{tpu_custom_call.1} parent=1 // pred_check_branch
      %52 = sbr.rel (0) target = $region21
    $region20: #{tpu_custom_call.1} parent=1 // pred_region
      _
    $region21: #{tpu_custom_call.1} parent=1 // pred_fallthru
      _
    // Predicated region
    $region22: #{tpu_custom_call.1} parent=1 // pred_check
      _
    $region23: #{tpu_custom_call.1} parent=1 // pred_check_branch
      %54 = sbr.rel (0) target = $region25
    $region24: #{tpu_custom_call.1} parent=1 // pred_region
      %55 = dma.done [#allocation3], 256
    $region25: #{tpu_custom_call.1} parent=1 // pred_fallthru
      _
    // Predicated region
    $region26: #{tpu_custom_call.1} parent=1 // pred_check
      _
    $region27: #{tpu_custom_call.1} parent=1 // pred_check_branch
      %57 = sbr.rel (0) target = $region29
    $region28: #{tpu_custom_call.1} parent=1 // pred_region
      %58 = dma.done [#allocation6], 1024
    $region29: #{tpu_custom_call.1} parent=1 // pred_fallthru
      _
    // Predicated region
    $region30: #{tpu_custom_call.1} parent=1 // pred_check
      _
    $region31: #{tpu_custom_call.1} parent=1 // pred_check_branch
      %60 = sbr.rel (0) target = $region33
    $region32: #{tpu_custom_call.1} parent=1 // pred_region
      %61 = dma.done [#allocation6], 2048
    $region33: #{tpu_custom_call.1} parent=1 // pred_fallthru
      _
    %v62 = vld [vmem:[#allocation2] sm:$0xff]
    %v63 = vld [vmem:[#allocation2 + $0x8] sm:$0xff]
    %v64 = vld [vmem:[#allocation5] sm:$0xff]
    %v65 = vld [vmem:[#allocation5 + $0x8] sm:$0xff]
    %v66 = vld [vmem:[#allocation5 + $0x10] sm:$0xff]
    %v67 = vld [vmem:[#allocation5 + $0x18] sm:$0xff]
    %v68 = vld [vmem:[#allocation5 + $0x20] sm:$0xff]
    %v69 = vld [vmem:[#allocation5 + $0x28] sm:$0xff]
    %v70 = vld [vmem:[#allocation5 + $0x30] sm:$0xff]
    %v71 = vld [vmem:[#allocation5 + $0x38] sm:$0xff]
    %v72 = vld [vmem:[%s2] sm:$0x1]
    %v74 = vlaneseq
    %v75 = vshrl.u32 %v74, 7
    %v76 = vsub.s32 0, %v75
    %v77 = vrot.slane %v72, %v76
    %vm79 = vcmask 523264
    %v81 = vsel %vm79, %v62, 0
    %v84 = vsel %vm79, %v63, 0
    %86 = vmatprep.subr.mxu0 0.0
    %87 = vmatpush1.msra.mxu0 %v64
    %88 = vmatprep.subr.mxu0 0.0
    %89 = vmatpush1.msra.mxu0 %v65
    %90 = vmatprep.subr.mxu0 0.0
    %91 = vmatpush1.msra.mxu0 %v66
    %92 = vmatprep.subr.mxu0 0.0
    %93 = vmatpush1.msra.mxu0 %v67
    %94 = vmatprep.subr.mxu0 0.0
    %95 = vmatpush1.msra.mxu0 %v68
    %96 = vmatprep.subr.mxu0 0.0
    %97 = vmatpush1.msra.mxu0 %v69
    %98 = vmatprep.subr.mxu0 0.0
    %99 = vmatpush1.msra.mxu0 %v70
    %100 = vmatprep.subr.mxu0 0.0
    %101 = vmatpush1.msra.mxu0 %v71
    %102 = vmatprep.subr.mxu0 0.0
    %103 = vmatpush1.msra.mxu0 0.0
    %104 = vmatprep.subr.mxu0 0.0
    %105 = vmatpush1.msra.mxu0 0.0
    %106 = vmatprep.subr.mxu0 0.0
    %107 = vmatpush1.msra.mxu0 0.0
    %108 = vmatprep.subr.mxu0 0.0
    %109 = vmatpush1.msra.mxu0 0.0
    %110 = vmatprep.subr.mxu0 0.0
    %111 = vmatpush1.msra.mxu0 0.0
    %112 = vmatprep.subr.mxu0 0.0
    %113 = vmatpush1.msra.mxu0 0.0
    %114 = vmatprep.subr.mxu0 0.0
    %115 = vmatpush1.msra.mxu0 0.0
    %116 = vmatprep.subr.mxu0 0.0
    %117 = vmatpush1.msra.mxu0 0.0
    %118 = vmatprep.subr.mxu0 0.0
    %119 = vmatpush1.msra.mxu0 0.0
    %120 = vmatprep.subr.mxu0 0.0
    %121 = vmatpush1.msra.mxu0 0.0
    %122 = vmatprep.subr.mxu0 0.0
    %123 = vmatpush1.msra.mxu0 0.0
    %124 = vmatprep.subr.mxu0 0.0
    %125 = vmatpush1.msra.mxu0 0.0
    %126 = vmatprep.subr.mxu0 0.0
    %127 = vmatpush1.msra.mxu0 0.0
    %128 = vmatprep.subr.mxu0 0.0
    %129 = vmatpush1.msra.mxu0 0.0
    %130 = vmatprep.subr.mxu0 0.0
    %131 = vmatpush1.msra.mxu0 0.0
    %132 = vmatprep.subr.mxu0 0.0
    %133 = vmatpush1.msra.mxu0 0.0
    %134 = vmatprep.subr.mxu0 0.0
    %135 = vmatpush1.msra.mxu0 0.0
    %136 = vmatprep.subr.mxu0 0.0
    %137 = vmatpush1.msra.mxu0 0.0
    %138 = vmatprep.subr.mxu0 0.0
    %139 = vmatpush1.msra.mxu0 0.0
    %140 = vmatprep.subr.mxu0 0.0
    %141 = vmatpush1.msra.mxu0 0.0
    %142 = vmatprep.subr.mxu0 0.0
    %143 = vmatpush1.msra.mxu0 0.0
    %144 = vmatprep.subr.mxu0 0.0
    %145 = vmatpush1.msra.mxu0 0.0
    %146 = vmatprep.subr.mxu0 0.0
    %147 = vmatpush1.msra.mxu0 0.0
    %148 = vmatprep.subr.mxu0 0.0
    %149 = vmatpush1.msra.mxu0 0.0
    %150 = vmatprep.mubr.f32.mxu0 0.0
    %151 = vmatmul.mubr.f32.gmra.mrb[0].mxu0 %v81
    %v152 = vpop.f32.mrb[0].mxu0
    %v153 = vadd.f32 %v77, %v152
    %v154 = vpop.f32.mrb[0].mxu0
    %155 = vmatprep.mubr.f32.mxu0 0.0
    %156 = vmatmul.mubr.f32.gmra.mrb[0].mxu0 %v84
    %v157 = vpop.f32.mrb[0].mxu0
    %v158 = vadd.f32 %v77, %v157
    %v159 = vpop.f32.mrb[0].mxu0
    %160 = vdwg.mxu0
    %v161 = vxor.u32 %v153, 2147483648
    %v162 = vxor.u32 %v158, 2147483648
    %v163 = vmul.f32 %v161, 1.442695
    %v164 = vpow.pop %v163
    %v165 = vmul.f32 %v162, 1.442695
    %v166 = vpow.pop %v165
    %v167 = vadd.f32 %v164, 1.0
    %v168 = vadd.f32 %v166, 1.0
    %v169 = vrcp.pop %v167
    %v170 = vmul.f32 1.0, %v169
    %v171 = vrcp.pop %v168
    %v172 = vmul.f32 1.0, %v171
    %v173 = vmul.f32 %v153, %v170
    %v174 = vmul.f32 %v158, %v172
    %v175 = vld [vmem:[#allocation7] sm:$0xff]
    %v176 = vld [vmem:[#allocation7 + $0x8] sm:$0xff]
    %v177 = vld [vmem:[#allocation7 + $0x10] sm:$0xff]
    %v178 = vld [vmem:[#allocation7 + $0x18] sm:$0xff]
    %v179 = vld [vmem:[#allocation7 + $0x20] sm:$0xff]
    %v180 = vld [vmem:[#allocation7 + $0x28] sm:$0xff]
    %v181 = vld [vmem:[#allocation7 + $0x30] sm:$0xff]
    %v182 = vld [vmem:[#allocation7 + $0x38] sm:$0xff]
    %v183 = vld [vmem:[#allocation7 + $0x40] sm:$0xff]
    %v184 = vld [vmem:[#allocation7 + $0x48] sm:$0xff]
    %v185 = vld [vmem:[#allocation7 + $0x50] sm:$0xff]
    %v186 = vld [vmem:[#allocation7 + $0x58] sm:$0xff]
    %v187 = vld [vmem:[#allocation7 + $0x60] sm:$0xff]
    %v188 = vld [vmem:[#allocation7 + $0x68] sm:$0xff]
    %v189 = vld [vmem:[#allocation7 + $0x70] sm:$0xff]
    %v190 = vld [vmem:[#allocation7 + $0x78] sm:$0xff]
    %v191 = vld [vmem:[%s4] sm:$0x1]
    %v193 = vlaneseq
    %v194 = vshrl.u32 %v193, 7
    %v195 = vsub.s32 0, %v194
    %v196 = vrot.slane %v191, %v195
    %198 = vmatprep.subr.mxu0 0.0
    %199 = vmatpush1.msra.mxu0 %v175
    %200 = vmatprep.subr.mxu0 0.0
    %201 = vmatpush1.msra.mxu0 %v176
    %202 = vmatprep.subr.mxu0 0.0
    %203 = vmatpush1.msra.mxu0 %v177
    %204 = vmatprep.subr.mxu0 0.0
    %205 = vmatpush1.msra.mxu0 %v178
    %206 = vmatprep.subr.mxu0 0.0
    %207 = vmatpush1.msra.mxu0 %v179
    %208 = vmatprep.subr.mxu0 0.0
    %209 = vmatpush1.msra.mxu0 %v180
    %210 = vmatprep.subr.mxu0 0.0
    %211 = vmatpush1.msra.mxu0 %v181
    %212 = vmatprep.subr.mxu0 0.0
    %213 = vmatpush1.msra.mxu0 %v182
    %214 = vmatprep.subr.mxu0 0.0
    %215 = vmatpush1.msra.mxu0 %v183
    %216 = vmatprep.subr.mxu0 0.0
    %217 = vmatpush1.msra.mxu0 %v184
    %218 = vmatprep.subr.mxu0 0.0
    %219 = vmatpush1.msra.mxu0 %v185
    %220 = vmatprep.subr.mxu0 0.0
    %221 = vmatpush1.msra.mxu0 %v186
    %222 = vmatprep.subr.mxu0 0.0
    %223 = vmatpush1.msra.mxu0 %v187
    %224 = vmatprep.subr.mxu0 0.0
    %225 = vmatpush1.msra.mxu0 %v188
    %226 = vmatprep.subr.mxu0 0.0
    %227 = vmatpush1.msra.mxu0 %v189
    %228 = vmatprep.subr.mxu0 0.0
    %229 = vmatpush1.msra.mxu0 %v190
    %230 = vmatprep.subr.mxu0 0.0
    %231 = vmatpush1.msra.mxu0 0.0
    %232 = vmatprep.subr.mxu0 0.0
    %233 = vmatpush1.msra.mxu0 0.0
    %234 = vmatprep.subr.mxu0 0.0
    %235 = vmatpush1.msra.mxu0 0.0
    %236 = vmatprep.subr.mxu0 0.0
    %237 = vmatpush1.msra.mxu0 0.0
    %238 = vmatprep.subr.mxu0 0.0
    %239 = vmatpush1.msra.mxu0 0.0
    %240 = vmatprep.subr.mxu0 0.0
    %241 = vmatpush1.msra.mxu0 0.0
    %242 = vmatprep.subr.mxu0 0.0
    %243 = vmatpush1.msra.mxu0 0.0
    %244 = vmatprep.subr.mxu0 0.0
    %245 = vmatpush1.msra.mxu0 0.0
    %246 = vmatprep.subr.mxu0 0.0
    %247 = vmatpush1.msra.mxu0 0.0
    %248 = vmatprep.subr.mxu0 0.0
    %249 = vmatpush1.msra.mxu0 0.0
    %250 = vmatprep.subr.mxu0 0.0
    %251 = vmatpush1.msra.mxu0 0.0
    %252 = vmatprep.subr.mxu0 0.0
    %253 = vmatpush1.msra.mxu0 0.0
    %254 = vmatprep.subr.mxu0 0.0
    %255 = vmatpush1.msra.mxu0 0.0
    %256 = vmatprep.subr.mxu0 0.0
    %257 = vmatpush1.msra.mxu0 0.0
    %258 = vmatprep.subr.mxu0 0.0
    %259 = vmatpush1.msra.mxu0 0.0
    %260 = vmatprep.subr.mxu0 0.0
    %261 = vmatpush1.msra.mxu0 0.0
    %262 = vmatprep.mubr.f32.mxu0 0.0
    %263 = vmatmul.mubr.f32.gmra.mrb[0].mxu0 %v173
    %v264 = vpop.f32.mrb[0].mxu0
    %v265 = vadd.f32 %v196, %v264
    %v266 = vpop.f32.mrb[0].mxu0
    %267 = vmatprep.mubr.f32.mxu0 0.0
    %268 = vmatmul.mubr.f32.gmra.mrb[0].mxu0 %v174
    %v269 = vpop.f32.mrb[0].mxu0
    %v270 = vadd.f32 %v196, %v269
    %v271 = vpop.f32.mrb[0].mxu0
    %272 = vdwg.mxu0
    %273 = vst [vmem:[#allocation8] sm:$0xff] %v265
    %274 = vst [vmem:[#allocation8 + $0x8] sm:$0xff] %v270
    // Predicated region
    $region34: #{tpu_custom_call.1} parent=1 // pred_check
      _
    $region35: #{tpu_custom_call.1} parent=1 // pred_check_branch
      %276 = sbr.rel (0) target = $region37
    $region36: #{tpu_custom_call.1} parent=1 // pred_region
      %s278 = ssub.s32 256, 256
      %279 = vsyncadd [#allocation4], %s278
      %s280 = sshll.u32 [#allocation8], 4
      %s281 = int_to_ptr.vmem [resolvable:$true] %s280
      %286 = dma.vmem_to_hbm [thread:$0]  %s281, 256, %s5, [#allocation4], 128, 128, 8
    $region37: #{tpu_custom_call.1} parent=1 // pred_fallthru
      _
    // Predicated region
    $region38: #{tpu_custom_call.1} parent=1 // pred_check
      _
    $region39: #{tpu_custom_call.1} parent=1 // pred_check_branch
      %288 = sbr.rel (0) target = $region41
    $region40: #{tpu_custom_call.1} parent=1 // pred_region
      %289 = dma.done [#allocation4], 256
    $region41: #{tpu_custom_call.1} parent=1 // pred_fallthru
      _
    %290 = vsyncpa [#allocation3], 1
    %291 = vsyncpa [#allocation6], 1
    %292 = vsyncpa [#allocation4], 1

</llo_original>
